<compile_context>
chip_gen: v6e
topology: v6e:2x2x1
jax: 0.10.0
libtpu: 0.0.40
codegen_flags: <defaults>
</compile_context>

<pallas_src>
import functools

import jax
import jax.numpy as jnp
from jax import lax
from jax.experimental import pallas as pl
from jax.experimental.pallas import tpu as pltpu


def _cross_attention_kernel(qt_ref, k_ref, v_ref, out_ref, *,
                            hw, needs_mask, exp_bf16):
    """One (batch, query-tile) grid step.

    qt_ref : (1, Tq, Cr)  bf16  pre-projected, pre-scaled Q^T tile
    k_ref  : (1, Cr, HWp) bf16  pre-projected K, resident per batch
    v_ref  : (1, C,  Tq)  bf16  pre-projected V tile (same spatial slice as Q)
    out_ref: (1, C, HWp)  f32   output block == accumulator (resident per batch)
    """
    jt = pl.program_id(1)

    @pl.when(jt == 0)
    def _init():
        out_ref[...] = jnp.zeros_like(out_ref)

    # scores (Tq, HWp): bf16 MXU matmul, f32 accumulation, lane-dense key axis.
    s = jnp.dot(qt_ref[0], k_ref[0], preferred_element_type=jnp.float32)

    if needs_mask:  # static flag: only emitted when HW was padded up to HWp
        key_idx = lax.broadcasted_iota(jnp.int32, s.shape, 1)
        s = jnp.where(key_idx < hw, s, -jnp.inf)

    # Row softmax over keys (key axis fully resident per row — no online pass).
    m = jnp.max(s, axis=-1, keepdims=True)                          # (Tq, 1)
    if exp_bf16:
        p = jnp.exp((s - m).astype(jnp.bfloat16))                   # bf16 EUP, emits P directly
        l = jnp.sum(p, axis=-1, keepdims=True, dtype=jnp.float32)   # f32 row sums
    else:
        p_f32 = jnp.exp(s - m)
        l = jnp.sum(p_f32, axis=-1, keepdims=True)
        p = p_f32.astype(jnp.bfloat16)

    # Normalize via V (a small (C,Tq) multiply) instead of P ((Tq,HWp)).
    r = pl.reciprocal(l, approx=False)                              # (Tq, 1) exact f32
    v_scaled = (v_ref[0].astype(jnp.float32) * r.reshape(1, -1)).astype(jnp.bfloat16)

    # out[c, i] += sum_j (v[c, j] / l[j]) * p[j, i]   (bf16 MXU, f32 accumulation)
    out_ref[0] += jnp.dot(v_scaled, p, preferred_element_type=jnp.float32)


def _round_up(x, m):
    return ((x + m - 1) // m) * m


def _vmem_capacity_bytes():
    try:
        return int(pltpu.get_tpu_info().vmem_capacity_bytes)
    except Exception:
        return 64 << 20          # v7x per-TensorCore VMEM: the safe lower bound


def _use_bf16_exp():
    try:
        kind = jax.devices()[0].device_kind.lower()
    except Exception:
        return True
    # v5e and older have no bf16 VPU/EUP; keep the exp path in f32 there.
    return not any(tag in kind for tag in ("v2", "v3", "v4", "v5"))


def _plan_tiling(hwp, c, cr, tq_forced=None):
    """Pick the query tile and a generation-aware vmem_limit_bytes."""
    capacity = _vmem_capacity_bytes()
    c_s8 = _round_up(c, 8)
    c_s16 = _round_up(c, 16)
    cr_s16 = _round_up(cr, 16)
    cr_lane = _round_up(cr, 128)

    resident = (2 * cr_s16 * hwp * 2      # K block (bf16, double-buffered)
                + 2 * c_s8 * hwp * 4)     # output/accumulator block (f32, dbl-buffered)

    def footprint(tq):
        return (resident
                + 2 * tq * cr_lane * 2    # Q^T tile (bf16, double-buffered)
                + 2 * c_s16 * tq * 2      # V tile (bf16, double-buffered)
                + tq * hwp * 12)          # f32 score slab + bf16 P + temps

    budget = capacity - (12 << 20)        # headroom for compiler scratch / pipeline

    if tq_forced is not None:
        tq = tq_forced
    else:
        cands = sorted({t for t in (1024, 512, 256, 128) if t <= hwp}
                       | ({hwp} if hwp <= 1024 else set()), reverse=True)
        tq = 128
        for cand in cands:
            if hwp % cand == 0 and footprint(cand) <= budget:
                tq = cand
                break
        # TODO(synk): for very large HW (score slab over budget even at tq=128),
        # add a key-chunked two-pass softmax path instead of relying on spill.
    vmem_limit = min(max(int(footprint(tq) * 1.25) + (2 << 20), 32 << 20),
                     capacity - (4 << 20))
    return tq, vmem_limit


def cross_attention_pallas(x_q, x_kv, params, *, tq=None):
    B, C, H, W = x_q.shape
    HW = H * W
    wq, bq = params["wq"], params["bq"]
    wk, bk = params["wk"], params["bk"]
    wv, bv = params["wv"], params["bv"]
    pos, gamma = params["pos"], params["gamma"]
    Cr = wq.shape[0]

    xq_f = x_q.reshape(B, C, HW).astype(jnp.float32)
    xkv_f = x_kv.reshape(B, C, HW).astype(jnp.float32)

    # 1x1-conv projections hoisted to XLA as batched GEMMs (f32), then cast to
    # bf16 for the kernel.  The 1/sqrt(Cr) score scale and the positional
    # encoding are folded into Q^T / K here.
    scale = 1.0 / float(Cr) ** 0.5
    qt = (jnp.einsum("bcn,rc->bnr", xq_f, wq.astype(jnp.float32))
          + (bq + pos).astype(jnp.float32)[None, None, :]) * scale      # (B, HW, Cr)
    k = (jnp.einsum("rc,bcn->brn", wk.astype(jnp.float32), xkv_f)
         + (bk + pos).astype(jnp.float32)[None, :, None])               # (B, Cr, HW)
    v = (jnp.einsum("oc,bcn->bon", wv.astype(jnp.float32), xkv_f)
         + bv.astype(jnp.float32)[None, :, None])                       # (B, C, HW)

    # Pad the spatial axis to a lane-aligned multiple of 128.  Padded Q^T / V
    # columns are zero (so padded queries contribute nothing); padded key
    # columns are masked to -inf inside the kernel.
    HWp = _round_up(HW, 128)
    pad = HWp - HW
    if pad:
        qt = jnp.pad(qt, ((0, 0), (0, pad), (0, 0)))
        k = jnp.pad(k, ((0, 0), (0, 0), (0, pad)))
        v = jnp.pad(v, ((0, 0), (0, 0), (0, pad)))
    qt_bf = qt.astype(jnp.bfloat16)
    k_bf = k.astype(jnp.bfloat16)
    v_bf = v.astype(jnp.bfloat16)

    tq, vmem_limit = _plan_tiling(HWp, C, Cr, tq_forced=tq)
    assert HWp % tq == 0, "query tile must divide padded H*W"
    njt = HWp // tq

    grid_spec = pltpu.PrefetchScalarGridSpec(
        num_scalar_prefetch=0,
        grid=(B, njt),
        in_specs=[
            pl.BlockSpec((1, tq, Cr), lambda b, j: (b, j, 0)),    # Q^T tile
            pl.BlockSpec((1, Cr, HWp), lambda b, j: (b, 0, 0)),   # K (resident per batch)
            pl.BlockSpec((1, C, tq), lambda b, j: (b, 0, j)),     # V tile
        ],
        out_specs=pl.BlockSpec((1, C, HWp), lambda b, j: (b, 0, 0)),
    )

    cost = pl.CostEstimate(
        flops=int(2 * B * HWp * HWp * (Cr + C)),
        transcendentals=int(B * HWp * HWp),
        bytes_accessed=int(qt_bf.size * 2 + k_bf.size * 2 + v_bf.size * 2
                           + B * C * HWp * 4),
    )

    acc = pl.pallas_call(
        functools.partial(_cross_attention_kernel, hw=HW,
                          needs_mask=(pad != 0), exp_bf16=_use_bf16_exp()),
        out_shape=jax.ShapeDtypeStruct((B, C, HWp), jnp.float32),
        grid_spec=grid_spec,
        compiler_params=pltpu.CompilerParams(
            dimension_semantics=("parallel", "arbitrary"),
            vmem_limit_bytes=vmem_limit),
        cost_estimate=cost,
    )(qt_bf, k_bf, v_bf)

    # Residual + gamma scaling as a trivial XLA elementwise op (out of kernel).
    # TODO(synk): on v7x with per-chip B < 2, split the query-tile axis into an
    # outer parallel axis of 2 (partial accumulators summed here) for megacore.
    out = gamma.astype(jnp.float32) * acc[:, :, :HW] + xq_f
    return out.reshape(B, C, H, W).astype(x_q.dtype)


def cross_attention_reference(x_q, x_kv, params):
    """Pure-JAX f32 reference mirroring the PyTorch forward exactly."""
    B, C, H, W = x_q.shape
    HW = H * W
    wq, bq = params["wq"], params["bq"]
    wk, bk = params["wk"], params["bk"]
    wv, bv = params["wv"], params["bv"]
    pos, gamma = params["pos"], params["gamma"]
    Cr = wq.shape[0]

    xq_f = x_q.reshape(B, C, HW).astype(jnp.float32)
    xkv_f = x_kv.reshape(B, C, HW).astype(jnp.float32)

    q = jnp.einsum("oc,bcn->bon", wq, xq_f) + bq[None, :, None] + pos[None, :, None]
    k = jnp.einsum("oc,bcn->bon", wk, xkv_f) + bk[None, :, None] + pos[None, :, None]
    v = jnp.einsum("oc,bcn->bon", wv, xkv_f) + bv[None, :, None]

    qp = q.transpose(0, 2, 1)   # (B, HW, Cr)
    kp = k.transpose(0, 2, 1)   # (B, HW, Cr)
    attn = jnp.einsum("bjc,bic->bji", qp, kp) / jnp.sqrt(jnp.float32(Cr))
    attn = jax.nn.softmax(attn, axis=-1)
    out = jnp.einsum("bcj,bji->bci", v, attn)   # (B, C, HW)
    return (gamma * out + xq_f).reshape(B, C, H, W).astype(x_q.dtype)


def make_params(key, in_channels, reduction_ratio=4):
    reduced = max(1, in_channels // reduction_ratio)
    ks = jax.random.split(key, 7)
    # NOTE: the PyTorch module initializes gamma to 0 (identity at init); we use
    # a nonzero gamma here so the attention path is actually exercised.
    return {
        "wq": 0.2 * jax.random.normal(ks[0], (reduced, in_channels), jnp.float32),
        "bq": 0.1 * jax.random.normal(ks[1], (reduced,), jnp.float32),
        "wk": 0.2 * jax.random.normal(ks[2], (reduced, in_channels), jnp.float32),
        "bk": 0.1 * jax.random.normal(ks[3], (reduced,), jnp.float32),
        "wv": 0.2 * jax.random.normal(ks[4], (in_channels, in_channels), jnp.float32),
        "bv": 0.1 * jax.random.normal(ks[5], (in_channels,), jnp.float32),
        "pos": jax.random.normal(ks[6], (reduced,), jnp.float32),
        "gamma": jnp.array(0.5, jnp.float32),
    }


if __name__ == "__main__":
    key = jax.random.PRNGKey(0)
    k_xq, k_xkv, k_p = jax.random.split(key, 3)

    # Case 1: lane-aligned spatial size, forced tq=128 so the per-batch
    # accumulation across query tiles is exercised (HW=256 -> 2 tiles).
    B, C, H, W = 2, 8, 16, 16           # HW = 256, Cr = 2
    x_q = jax.random.normal(k_xq, (B, C, H, W), jnp.float32)
    x_kv = jax.random.normal(k_xkv, (B, C, H, W), jnp.float32)
    params = make_params(k_p, C, reduction_ratio=4)

    fn = jax.jit(cross_attention_pallas, static_argnames=("tq",))
    out = jax.block_until_ready(fn(x_q, x_kv, params, tq=128))
    ref = cross_attention_reference(x_q, x_kv, params)
    assert out.shape == (B, C, H, W)
    err1 = float(jnp.max(jnp.abs(out.astype(jnp.float32) - ref.astype(jnp.float32))))
    # Tolerance loosened vs f32: bf16 MXU operands + bf16 exp on v6e/v7x.
    assert jnp.allclose(out, ref, rtol=3e-2, atol=3e-2), f"case1 mismatch: {err1}"

    # Case 2: non-lane-aligned spatial size (HW=144 -> padded to 256, masked
    # key columns) with automatic tile / VMEM planning.
    B2, H2, W2 = 1, 12, 12
    x_q2 = jax.random.normal(jax.random.PRNGKey(1), (B2, C, H2, W2), jnp.float32)
    x_kv2 = jax.random.normal(jax.random.PRNGKey(2), (B2, C, H2, W2), jnp.float32)
    out2 = jax.block_until_ready(fn(x_q2, x_kv2, params))
    ref2 = cross_attention_reference(x_q2, x_kv2, params)
    assert out2.shape == (B2, C, H2, W2)
    err2 = float(jnp.max(jnp.abs(out2.astype(jnp.float32) - ref2.astype(jnp.float32))))
    assert jnp.allclose(out2, ref2, rtol=3e-2, atol=3e-2), f"case2 mismatch: {err2}"

    print("KERNEL_OK")
</pallas_src>

<mosaic_0001>
module attributes {stable_mosaic.version = 11 : i64} {
  func.func @_cross_attention_kernel(%arg0: i32, %arg1: i32, %arg2: memref<1x128x2xbf16, #tpu.memory_space<vmem>>, %arg3: memref<1x2x256xbf16, #tpu.memory_space<vmem>>, %arg4: memref<1x8x128xbf16, #tpu.memory_space<vmem>>, %arg5: memref<1x8x256xf32, #tpu.memory_space<vmem>>) attributes {dimension_semantics = [#tpu.dimension_semantics<parallel>, #tpu.dimension_semantics<arbitrary>], iteration_bounds = array<i64: 2, 2>, scalar_prefetch = 0 : i64, scratch_operands = 0 : i64, tpu.core_type = #tpu.core_type<tc>, window_params = [{transform_indices = @transform_0, window_bounds = array<i64: 1, 128, 2>}, {transform_indices = @transform_1, window_bounds = array<i64: 1, 2, 256>}, {transform_indices = @transform_2, window_bounds = array<i64: 1, 8, 128>}, {transform_indices = @transform_3, window_bounds = array<i64: 1, 8, 256>}]} {
    %c0_i32 = arith.constant 0 : i32
    %0 = arith.cmpi eq, %arg1, %c0_i32 : i32
    %1 = arith.extui %0 : i1 to i32
    %c0_i32_0 = arith.constant 0 : i32
    %2 = arith.cmpi ne, %1, %c0_i32_0 : i32
    scf.if %2 {
      %cst_18 = arith.constant 0.000000e+00 : f32
      %32 = vector.broadcast %cst_18 : f32 to vector<1x8x256xf32>
      %c0_19 = arith.constant 0 : index
      %c0_20 = arith.constant 0 : index
      %c0_21 = arith.constant 0 : index
      %33 = vector.load %arg5[%c0_19, %c0_20, %c0_21] : memref<1x8x256xf32, #tpu.memory_space<vmem>>, vector<1x8x256xf32>
      tpu.vector_store %arg5[%c0_19, %c0_20, %c0_21], %32 {strides = array<i32>} : memref<1x8x256xf32, #tpu.memory_space<vmem>>, vector<1x8x256xf32>,
    } else {
    }
    %c0 = arith.constant 0 : index
    %c0_1 = arith.constant 0 : index
    %c0_2 = arith.constant 0 : index
    %3 = vector.load %arg2[%c0, %c0_1, %c0_2] : memref<1x128x2xbf16, #tpu.memory_space<vmem>>, vector<1x128x2xbf16>
    %4 = vector.shape_cast %3 : vector<1x128x2xbf16> to vector<128x2xbf16>
    %c0_3 = arith.constant 0 : index
    %c0_4 = arith.constant 0 : index
    %c0_5 = arith.constant 0 : index
    %5 = vector.load %arg3[%c0_3, %c0_4, %c0_5] : memref<1x2x256xbf16, #tpu.memory_space<vmem>>, vector<1x2x256xbf16>
    %6 = vector.shape_cast %5 : vector<1x2x256xbf16> to vector<2x256xbf16>
    %cst = arith.constant dense<0.000000e+00> : vector<128x256xf32>
    %7 = tpu.matmul %4, %6, %cst {dimension_numbers = #tpu.dot_dimension_numbers<[1], [0], [0], [1], [0, 0, 1, 1], [], []>} : vector<128x2xbf16>, vector<2x256xbf16>, vector<128x256xf32> -> vector<128x256xf32>
    %cst_6 = arith.constant dense<0xFF800000> : vector<128xf32>
    %8 = vector.multi_reduction <maximumf>, %7, %cst_6 [1] : vector<128x256xf32> to vector<128xf32>
    %9 = vector.shape_cast %8 : vector<128xf32> to vector<128x1xf32>
    %10 = vector.broadcast %9 : vector<128x1xf32> to vector<128x256xf32>
    %11 = arith.subf %7, %10 : vector<128x256xf32>
    %12 = arith.truncf %11 : vector<128x256xf32> to vector<128x256xbf16>
    %13 = math.exp %12 : vector<128x256xbf16>
    %14 = arith.extf %13 : vector<128x256xbf16> to vector<128x256xf32>
    %cst_7 = arith.constant dense<0.000000e+00> : vector<128xf32>
    %15 = vector.multi_reduction <add>, %14, %cst_7 [1] : vector<128x256xf32> to vector<128xf32>
    %16 = vector.shape_cast %15 : vector<128xf32> to vector<128x1xf32>
    %17 = tpu.reciprocal %16 : vector<128x1xf32> -> vector<128x1xf32>
    %c0_8 = arith.constant 0 : index
    %c0_9 = arith.constant 0 : index
    %c0_10 = arith.constant 0 : index
    %18 = vector.load %arg4[%c0_8, %c0_9, %c0_10] : memref<1x8x128xbf16, #tpu.memory_space<vmem>>, vector<1x8x128xbf16>
    %19 = vector.shape_cast %18 : vector<1x8x128xbf16> to vector<8x128xbf16>
    %20 = arith.extf %19 : vector<8x128xbf16> to vector<8x128xf32>
    %21 = vector.shape_cast %17 : vector<128x1xf32> to vector<1x128xf32>
    %22 = vector.broadcast %21 : vector<1x128xf32> to vector<8x128xf32>
    %23 = arith.mulf %20, %22 : vector<8x128xf32>
    %24 = arith.truncf %23 : vector<8x128xf32> to vector<8x128xbf16>
    %c0_11 = arith.constant 0 : index
    %c0_12 = arith.constant 0 : index
    %c0_13 = arith.constant 0 : index
    %25 = vector.load %arg5[%c0_11, %c0_12, %c0_13] : memref<1x8x256xf32, #tpu.memory_space<vmem>>, vector<1x8x256xf32>
    %26 = vector.shape_cast %25 : vector<1x8x256xf32> to vector<8x256xf32>
    %cst_14 = arith.constant dense<0.000000e+00> : vector<8x256xf32>
    %27 = tpu.matmul %24, %13, %cst_14 {dimension_numbers = #tpu.dot_dimension_numbers<[1], [0], [0], [1], [0, 0, 1, 1], [], []>} : vector<8x128xbf16>, vector<128x256xbf16>, vector<8x256xf32> -> vector<8x256xf32>
    %28 = arith.addf %26, %27 : vector<8x256xf32>
    %c0_15 = arith.constant 0 : index
    %c0_16 = arith.constant 0 : index
    %c0_17 = arith.constant 0 : index
    %29 = vector.load %arg5[%c0_15, %c0_16, %c0_17] : memref<1x8x256xf32, #tpu.memory_space<vmem>>, vector<1x8x256xf32>
    %30 = vector.shape_cast %29 : vector<1x8x256xf32> to vector<8x256xf32>
    %31 = vector.shape_cast %28 : vector<8x256xf32> to vector<1x8x256xf32>
    tpu.vector_store %arg5[%c0_15, %c0_16, %c0_17], %31 {strides = array<i32>} : memref<1x8x256xf32, #tpu.memory_space<vmem>>, vector<1x8x256xf32>,
    return
  }
  func.func @transform_0(%arg0: i32, %arg1: i32) -> (i32, i32, i32) {
    %c0_i32 = arith.constant 0 : i32
    %c0_i32_0 = arith.constant 0 : i32
    return %arg0, %arg1, %c0_i32 : i32, i32, i32
  }
  func.func @transform_1(%arg0: i32, %arg1: i32) -> (i32, i32, i32) {
    %c0_i32 = arith.constant 0 : i32
    %c0_i32_0 = arith.constant 0 : i32
    %c0_i32_1 = arith.constant 0 : i32
    return %arg0, %c0_i32, %c0_i32_0 : i32, i32, i32
  }
  func.func @transform_2(%arg0: i32, %arg1: i32) -> (i32, i32, i32) {
    %c0_i32 = arith.constant 0 : i32
    %c0_i32_0 = arith.constant 0 : i32
    return %arg0, %c0_i32, %arg1 : i32, i32, i32
  }
  func.func @transform_3(%arg0: i32, %arg1: i32) -> (i32, i32, i32) {
    %c0_i32 = arith.constant 0 : i32
    %c0_i32_0 = arith.constant 0 : i32
    %c0_i32_1 = arith.constant 0 : i32
    return %arg0, %c0_i32, %c0_i32_0 : i32, i32, i32
  }
}

</mosaic_0001>

<llo_original>
// kernel: cross_attention_pallas.1
$region0: #{cross_attention_pallas.1}
  #allocation0 [shape = 'u32[]', space=smem, size = 0x4, offset = 0x4, fixed_abs, tag = 'smem constant byte address 0x4 - core index']
  #allocation1 [shape = 'u32[144,128]{1,0:T(1,128)}', space=vmem, size = 0x12000, scoped, tag = 'internal scratch']
  %s0 = inlined_call_operand.vmem [shape: bf16[2,256,2], index: 0, kind: input, shape index: {}]
  %s1 = inlined_call_operand.vmem [shape: bf16[2,2,256], index: 1, kind: input, shape index: {}]
  %s2 = inlined_call_operand.vmem [shape: bf16[2,8,256], index: 2, kind: input, shape index: {}]
  %s3 = inlined_call_operand.vmem [shape: f32[2,8,256], index: 3, kind: output, shape index: {}]
  %s4 = sld [smem:[#allocation0]]
  $region49: #{cross_attention_pallas.1} parent=0
    _
  %s6 = ssub.s32 1, %s4
  %s7 = scalar_select 0, %s6, %s4
  loop: start=0, step=1, limit=6
  $region2: #{cross_attention_pallas.1} parent=0 // loop_pre_header
    _
  $region3: #{cross_attention_pallas.1} parent=0 // loop_header
    %s9 = sphi 0, %s13
    %p10 = scmp.ge.s32.totalorder %s9, 6
    %s16 = sphi 0, %s28
    %s17 = sphi 0, %s24
    %s18 = sphi 0, %s16
    %s19 = sphi 0, %s17
    %s20 = sphi 0, %s18
    %s21 = sphi 0, %s19
    %s33 = sphi 0, %s35
    %s36 = sphi 0, %s33
    %s37 = sphi 0, %s36
    %s53 = sphi 0, %s37
    %s59 = sphi 0, %s61
    %s62 = sphi 0, %s59
    %s63 = sphi 0, %s62
    %s79 = sphi 0, %s63
    %s87 = sphi 0, %s89
    %s90 = sphi 0, %s87
    %s91 = sphi 0, %s90
    %s107 = sphi 0, %s91
    %s113 = sphi 0, %s115
    %s116 = sphi 0, %s113
    %s117 = sphi 0, %s116
    %s133 = sphi 0, %s117
  $region4: #{cross_attention_pallas.1} parent=0 // loop_header_branch
    %12 = sbr.rel (%p10) target = $region8
  $region5: #{cross_attention_pallas.1} parent=0 // loop_body
    %s14 = ssub.s32 %s9, 1
    %s15 = ssub.s32 %s9, 2
    %s22 = sadd.s32 1, %s17
    %p23 = scmp.ge.s32.totalorder %s22, 2
    %s24 = scalar_select %p23, 0, %s22
    %s25 = sadd.s32 1, %s16
    %s26 = scalar_select %p23, %s25, %s16
    %p27 = scmp.ge.s32.totalorder %s26, 2
    %s28 = scalar_select %p27, 0, %s26
    %s29 = ssub.s32 %s16, %s28
    %s30 = ssub.s32 %s17, %s24
    %s31 = sor.u32 %s29, %s30
    %p32 = scmp.eq.s32.totalorder %s31, 0
    %s34 = sadd.s32 %s33, 1
    %s35 = scalar_select %p32, %s33, %s34
    %p38 = pneg %p32
    %p39 = scmp.eq.s32.totalorder %s9, 3
    %p40 = por %p38, %p39
    %p41 = scmp.ne.s32.totalorder %s33, %s36
    %p42 = scmp.eq.s32.totalorder %s9, 0
    %p43 = por %p41, %p42
    %p44 = scmp.ne.s32.totalorder %s33, %s36
    %p45 = scmp.eq.s32.totalorder %s14, 3
    %p46 = por %p44, %p45
    %p47 = scmp.ne.s32.totalorder %s36, %s37
    %p48 = scmp.eq.s32.totalorder %s14, 0
    %p49 = por %p47, %p48
    %p50 = scmp.ne.s32.totalorder %s36, %s37
    %p51 = scmp.eq.s32.totalorder %s15, 3
    %p52 = por %p50, %p51
    %p54 = scmp.ne.s32.totalorder %s37, %s53
    %p55 = scmp.eq.s32.totalorder %s15, 0
    %p56 = por %p54, %p55
    %s57 = ssub.s32 %s16, %s28
    %p58 = scmp.eq.s32.totalorder %s57, 0
    %s60 = sadd.s32 %s59, 1
    %s61 = scalar_select %p58, %s59, %s60
    %p64 = pneg %p58
    %p65 = scmp.eq.s32.totalorder %s9, 3
    %p66 = por %p64, %p65
    %p67 = scmp.ne.s32.totalorder %s59, %s62
    %p68 = scmp.eq.s32.totalorder %s9, 0
    %p69 = por %p67, %p68
    %p70 = scmp.ne.s32.totalorder %s59, %s62
    %p71 = scmp.eq.s32.totalorder %s14, 3
    %p72 = por %p70, %p71
    %p73 = scmp.ne.s32.totalorder %s62, %s63
    %p74 = scmp.eq.s32.totalorder %s14, 0
    %p75 = por %p73, %p74
    %p76 = scmp.ne.s32.totalorder %s62, %s63
    %p77 = scmp.eq.s32.totalorder %s15, 3
    %p78 = por %p76, %p77
    %p80 = scmp.ne.s32.totalorder %s63, %s79
    %p81 = scmp.eq.s32.totalorder %s15, 0
    %p82 = por %p80, %p81
    %s83 = ssub.s32 %s16, %s28
    %s84 = ssub.s32 %s17, %s24
    %s85 = sor.u32 %s83, %s84
    %p86 = scmp.eq.s32.totalorder %s85, 0
    %s88 = sadd.s32 %s87, 1
    %s89 = scalar_select %p86, %s87, %s88
    %p92 = pneg %p86
    %p93 = scmp.eq.s32.totalorder %s9, 3
    %p94 = por %p92, %p93
    %p95 = scmp.ne.s32.totalorder %s87, %s90
    %p96 = scmp.eq.s32.totalorder %s9, 0
    %p97 = por %p95, %p96
    %p98 = scmp.ne.s32.totalorder %s87, %s90
    %p99 = scmp.eq.s32.totalorder %s14, 3
    %p100 = por %p98, %p99
    %p101 = scmp.ne.s32.totalorder %s90, %s91
    %p102 = scmp.eq.s32.totalorder %s14, 0
    %p103 = por %p101, %p102
    %p104 = scmp.ne.s32.totalorder %s90, %s91
    %p105 = scmp.eq.s32.totalorder %s15, 3
    %p106 = por %p104, %p105
    %p108 = scmp.ne.s32.totalorder %s91, %s107
    %p109 = scmp.eq.s32.totalorder %s15, 0
    %p110 = por %p108, %p109
    %s111 = ssub.s32 %s16, %s28
    %p112 = scmp.eq.s32.totalorder %s111, 0
    %s114 = sadd.s32 %s113, 1
    %s115 = scalar_select %p112, %s113, %s114
    %p118 = pneg %p112
    %p119 = scmp.eq.s32.totalorder %s9, 3
    %p120 = por %p118, %p119
    %p121 = scmp.ne.s32.totalorder %s113, %s116
    %p122 = scmp.eq.s32.totalorder %s9, 0
    %p123 = por %p121, %p122
    %p124 = scmp.ne.s32.totalorder %s113, %s116
    %p125 = scmp.eq.s32.totalorder %s14, 3
    %p126 = por %p124, %p125
    %p127 = scmp.ne.s32.totalorder %s116, %s117
    %p128 = scmp.eq.s32.totalorder %s14, 0
    %p129 = por %p127, %p128
    %p130 = scmp.ne.s32.totalorder %s116, %s117
    %p131 = scmp.eq.s32.totalorder %s15, 3
    %p132 = por %p130, %p131
    %p134 = scmp.ne.s32.totalorder %s117, %s133
    %p135 = scmp.eq.s32.totalorder %s15, 0
    %p136 = por %p134, %p135
    %p137 = scmp.le.s32.totalorder 1, %s9
    %p138 = scmp.lt.s32.totalorder %s9, 5
    %p139 = pnand %p137, %p138
    %p140 = pneg %p139
    // Predicated region
    $region9: #{cross_attention_pallas.1} parent=5 // pred_check
      _
    $region10: #{cross_attention_pallas.1} parent=5 // pred_check_branch
      %142 = sbr.rel (%p139) target = $region12
    $region11: #{cross_attention_pallas.1} parent=5 // pred_region
      %s143 = ssub.s32 %s9, 1
    $region12: #{cross_attention_pallas.1} parent=5 // pred_fallthru
      _
    %p144 = scmp.lt.s32.totalorder %s9, 4
    // Predicated region
    $region13: #{cross_attention_pallas.1} parent=5 // pred_check
      %p145 = pneg %p144
    $region14: #{cross_attention_pallas.1} parent=5 // pred_check_branch
      %147 = sbr.rel (%p145) target = $region16
    $region15: #{cross_attention_pallas.1} parent=5 // pred_region
      // Predicated region
      $region17: #{cross_attention_pallas.1} parent=15 // pred_check
        %p148 = pneg %p43
      $region18: #{cross_attention_pallas.1} parent=15 // pred_check_branch
        %150 = sbr.rel (%p148) target = $region20
      $region19: #{cross_attention_pallas.1} parent=15 // pred_region
        %s151 = smul.u32 16, %s17
        %p152 = scmp.lt.s32.totalorder %s16, 1
        %s153 = scalar_select %p152, %s16, 1
        %p154 = scmp.lt.s32.totalorder %s151, 31
        %s155 = scalar_select %p154, %s151, 31
        %s156 = smul.addr %s153, 32
        %s157 = sadd.s32 %s155, %s156
        %s158 = smul.addr %s157, 4
        %s159 = scalar_lea.vmem %s0, %s158
        %s160 = smul.u32 16, %s17
      $region20: #{cross_attention_pallas.1} parent=15 // pred_fallthru
        _
      // Predicated region
      $region21: #{cross_attention_pallas.1} parent=15 // pred_check
        %p161 = pneg %p69
      $region22: #{cross_attention_pallas.1} parent=15 // pred_check_branch
        %163 = sbr.rel (%p161) target = $region24
      $region23: #{cross_attention_pallas.1} parent=15 // pred_region
        %p164 = scmp.lt.s32.totalorder %s16, 1
        %s165 = scalar_select %p164, %s16, 1
        %s166 = smul.addr %s165, 2
        %s167 = scalar_lea.vmem %s1, %s166
      $region24: #{cross_attention_pallas.1} parent=15 // pred_fallthru
        _
      // Predicated region
      $region25: #{cross_attention_pallas.1} parent=15 // pred_check
        %p168 = pneg %p97
      $region26: #{cross_attention_pallas.1} parent=15 // pred_check_branch
        %170 = sbr.rel (%p168) target = $region28
      $region27: #{cross_attention_pallas.1} parent=15 // pred_region
        %p171 = scmp.lt.s32.totalorder %s16, 1
        %s172 = scalar_select %p171, %s16, 1
        %p173 = scmp.lt.s32.totalorder %s17, 1
        %s174 = scalar_select %p173, %s17, 1
        %s175 = smul.addr %s172, 2
        %s176 = sadd.s32 %s174, %s175
        %s177 = smul.addr %s176, 4
        %s178 = scalar_lea.vmem %s2, %s177
      $region28: #{cross_attention_pallas.1} parent=15 // pred_fallthru
        _
    $region16: #{cross_attention_pallas.1} parent=5 // pred_fallthru
      _
    %p179 = scmp.le.s32.totalorder 1, %s9
    %p180 = scmp.lt.s32.totalorder %s9, 5
    %p181 = pnand %p179, %p180
    %p182 = pneg %p181
    // Predicated region
    $region29: #{cross_attention_pallas.1} parent=5 // pred_check
      _
    $region30: #{cross_attention_pallas.1} parent=5 // pred_check_branch
      %184 = sbr.rel (%p181) target = $region32
    $region31: #{cross_attention_pallas.1} parent=5 // pred_region
      %s185 = ssub.s32 %s9, 1
      %s186 = smul.u32 16, %s19
      %p187 = scmp.lt.s32.totalorder %s18, 1
      %s188 = scalar_select %p187, %s18, 1
      %p189 = scmp.lt.s32.totalorder %s186, 31
      %s190 = scalar_select %p189, %s186, 31
      %s191 = smul.addr %s188, 32
      %s192 = sadd.s32 %s190, %s191
      %s193 = smul.addr %s192, 4
      %s194 = scalar_lea.vmem %s0, %s193
      %p195 = pneg %p49
      %p196 = pneg %p46
      %p197 = scmp.lt.s32.totalorder %s18, 1
      %s198 = scalar_select %p197, %s18, 1
      %s199 = smul.addr %s198, 2
      %s200 = scalar_lea.vmem %s1, %s199
      %p201 = pneg %p75
      %p202 = pneg %p72
      %p203 = scmp.lt.s32.totalorder %s18, 1
      %s204 = scalar_select %p203, %s18, 1
      %p205 = scmp.lt.s32.totalorder %s19, 1
      %s206 = scalar_select %p205, %s19, 1
      %s207 = smul.addr %s204, 2
      %s208 = sadd.s32 %s206, %s207
      %s209 = smul.addr %s208, 4
      %s210 = scalar_lea.vmem %s2, %s209
      %p211 = pneg %p103
      %p212 = pneg %p100
      %p213 = pneg %p129
      %p214 = pneg %p126
      %p215 = scmp.lt.s32.totalorder %s18, 1
      %s216 = scalar_select %p215, %s18, 1
      %s217 = smul.addr %s216, 2
      %s218 = smul.addr %s217, 8
      %s219 = scalar_lea.vmem %s3, %s218
      %s220 = smul.u32 16, %s19
      %p221 = scmp.lt.s32.totalorder %s18, 1
      %s222 = scalar_select %p221, %s18, 1
      %p223 = scmp.lt.s32.totalorder %s220, 31
      %s224 = scalar_select %p223, %s220, 31
      %s225 = smul.addr %s222, 32
      %s226 = sadd.s32 %s224, %s225
      %s227 = smul.addr %s226, 4
      %s228 = scalar_lea.vmem %s0, %s227
      %s229 = smul.u32 16, %s19
      %p230 = scmp.lt.s32.totalorder %s18, 1
      %s231 = scalar_select %p230, %s18, 1
      %s232 = smul.addr %s231, 2
      %s233 = scalar_lea.vmem %s1, %s232
      %p234 = scmp.lt.s32.totalorder %s18, 1
      %s235 = scalar_select %p234, %s18, 1
      %p236 = scmp.lt.s32.totalorder %s19, 1
      %s237 = scalar_select %p236, %s19, 1
      %s238 = smul.addr %s235, 2
      %s239 = sadd.s32 %s237, %s238
      %s240 = smul.addr %s239, 4
      %s241 = scalar_lea.vmem %s2, %s240
      %p242 = scmp.lt.s32.totalorder %s18, 1
      %s243 = scalar_select %p242, %s18, 1
      %s244 = smul.addr %s243, 2
      %s245 = smul.addr %s244, 8
      %s246 = scalar_lea.vmem %s3, %s245
      %p248 = scmp.eq.s32.totalorder %s19, 0
      // Predicated region
      $region33: #{cross_attention_pallas.1} parent=31 // pred_check
        %p249 = pneg %p248
      $region34: #{cross_attention_pallas.1} parent=31 // pred_check_branch
        %251 = sbr.rel (%p249) target = $region36
      $region35: #{cross_attention_pallas.1} parent=31 // pred_region
        %252 = vst [vmem:[%s246] sm:$0xff] 0.0
        %253 = vst [vmem:[%s246 + $0x8] sm:$0xff] 0.0
      $region36: #{cross_attention_pallas.1} parent=31 // pred_fallthru
        _
      %v254 = vld [vmem:[%s228] sm:$0xf]
      %v255 = vld [vmem:[%s228 + $0x4] sm:$0xf]
      %v256 = vld [vmem:[%s228 + $0x8] sm:$0xf]
      %v257 = vld [vmem:[%s228 + $0xc] sm:$0xf]
      %v258 = vld [vmem:[%s228 + $0x10] sm:$0xf]
      %v259 = vld [vmem:[%s228 + $0x14] sm:$0xf]
      %v260 = vld [vmem:[%s228 + $0x18] sm:$0xf]
      %v261 = vld [vmem:[%s228 + $0x1c] sm:$0xf]
      %v262 = vld [vmem:[%s228 + $0x20] sm:$0xf]
      %v263 = vld [vmem:[%s228 + $0x24] sm:$0xf]
      %v264 = vld [vmem:[%s228 + $0x28] sm:$0xf]
      %v265 = vld [vmem:[%s228 + $0x2c] sm:$0xf]
      %v266 = vld [vmem:[%s228 + $0x30] sm:$0xf]
      %v267 = vld [vmem:[%s228 + $0x34] sm:$0xf]
      %v268 = vld [vmem:[%s228 + $0x38] sm:$0xf]
      %v269 = vld [vmem:[%s228 + $0x3c] sm:$0xf]
      %v270 = vld [vmem:[%s233] sm:$0x3]
      %v287 = vunpack.c.l.b16 %v254
      %v288 = vunpack.c.l.b16 %v255
      %v289 = vunpack.c.l.b16 %v256
      %v290 = vunpack.c.l.b16 %v257
      %v291 = vunpack.c.l.b16 %v258
      %v292 = vunpack.c.l.b16 %v259
      %v293 = vunpack.c.l.b16 %v260
      %v294 = vunpack.c.l.b16 %v261
      %v295 = vunpack.c.l.b16 %v262
      %v296 = vunpack.c.l.b16 %v263
      %v297 = vunpack.c.l.b16 %v264
      %v298 = vunpack.c.l.b16 %v265
      %v299 = vunpack.c.l.b16 %v266
      %v300 = vunpack.c.l.b16 %v267
      %v301 = vunpack.c.l.b16 %v268
      %v302 = vunpack.c.l.b16 %v269
      %v303 = vpack.c.b16 %v288, %v287
      %v304 = vpack.c.b16 %v290, %v289
      %v305 = vpack.c.b16 %v292, %v291
      %v306 = vpack.c.b16 %v294, %v293
      %v307 = vpack.c.b16 %v296, %v295
      %v308 = vpack.c.b16 %v298, %v297
      %v309 = vpack.c.b16 %v300, %v299
      %v310 = vpack.c.b16 %v302, %v301
      %v313 = vunpack.c.l.s4 1966171168
      %v314 = vunpack.c.0.s8 %v313
      %v315 = vlaneseq
      %v316 = vshrl.u32 %v315, 7
      %v317 = vsub.s32 %v314, %v316
      %v318 = vrot.slane %v270, %v317
      %v319 = vcombine.high %v318, %v318
      %v321 = vunpack.c.l.s4 1966171168
      %v322 = vunpack.c.0.s8 %v321
      %v323 = vlaneseq
      %v324 = vshrl.u32 %v323, 7
      %v325 = vsub.s32 %v322, %v324
      %v326 = vrot.slane %v318, %v325
      %v328 = vunpack.c.l.s4 1966171168
      %v329 = vunpack.c.0.s8 %v328
      %v330 = vlaneseq
      %v331 = vshrl.u32 %v330, 7
      %v332 = vsub.s32 %v329, %v331
      %v333 = vrot.slane %v319, %v332
      %vm334 = vcmask 15360
      %v336 = vsel %vm334, %v303, 0
      %v339 = vsel %vm334, %v304, 0
      %v342 = vsel %vm334, %v305, 0
      %v345 = vsel %vm334, %v306, 0
      %v348 = vsel %vm334, %v307, 0
      %v351 = vsel %vm334, %v308, 0
      %v354 = vsel %vm334, %v309, 0
      %v357 = vsel %vm334, %v310, 0
      %vm359 = vcmask 1040384
      %v361 = vsel %vm359, %v326, 0
      %v364 = vsel %vm359, %v333, 0
      %366 = vmatprep.subr.bf16.mxu0 0
      %367 = vmatpush1.bf16.msra.mxu0 0
      %368 = vmatprep.subr.bf16.mxu0 0
      %369 = vmatpush1.bf16.msra.mxu0 0
      %370 = vmatprep.subr.bf16.mxu0 0
      %371 = vmatpush1.bf16.msra.mxu0 0
      %372 = vmatprep.subr.bf16.mxu0 0
      %373 = vmatpush1.bf16.msra.mxu0 0
      %374 = vmatprep.subr.bf16.mxu0 0
      %375 = vmatpush1.bf16.msra.mxu0 0
      %376 = vmatprep.subr.bf16.mxu0 0
      %377 = vmatpush1.bf16.msra.mxu0 0
      %378 = vmatprep.subr.bf16.mxu0 0
      %379 = vmatpush1.bf16.msra.mxu0 0
      %380 = vmatprep.subr.bf16.mxu0 %v364
      %381 = vmatpush1.bf16.msra.mxu0 %v361
      %382 = vmatprep.subr.bf16.mxu0 0
      %383 = vmatpush2.bf16.msra.mxu0 0
      %384 = vmatprep.subr.bf16.mxu0 0
      %385 = vmatpush2.bf16.msra.mxu0 0
      %386 = vmatprep.subr.bf16.mxu0 0
      %387 = vmatpush2.bf16.msra.mxu0 0
      %388 = vmatprep.subr.bf16.mxu0 0
      %389 = vmatpush2.bf16.msra.mxu0 0
      %390 = vmatprep.subr.bf16.mxu0 0
      %391 = vmatpush2.bf16.msra.mxu0 0
      %392 = vmatprep.subr.bf16.mxu0 0
      %393 = vmatpush2.bf16.msra.mxu0 0
      %394 = vmatprep.subr.bf16.mxu0 0
      %395 = vmatpush2.bf16.msra.mxu0 0
      %396 = vmatprep.subr.bf16.mxu0 0
      %397 = vmatpush2.bf16.msra.mxu0 0
      %398 = vmatprep.mubr.bf16.mxu0 0
      %399 = vmatmul.mubr.bf16.gmra.mxu0 %v336
      %v400 = vpop.f32.mrf.mxu0
      %v401 = vadd.f32 0.0, %v400
      %v402 = vpop.f32.mrf.mxu0
      %v403 = vadd.f32 0.0, %v402
      %v404 = vpop.f32.mrf.mxu0
      %v405 = vadd.f32 0.0, %v404
      %v406 = vpop.f32.mrf.mxu0
      %v407 = vadd.f32 0.0, %v406
      %408 = vmatprep.mubr.bf16.mxu0 0
      %409 = vmatmul.mubr.bf16.gmra.mxu0 %v339
      %v410 = vpop.f32.mrf.mxu0
      %v411 = vadd.f32 0.0, %v410
      %v412 = vpop.f32.mrf.mxu0
      %v413 = vadd.f32 0.0, %v412
      %v414 = vpop.f32.mrf.mxu0
      %v415 = vadd.f32 0.0, %v414
      %v416 = vpop.f32.mrf.mxu0
      %v417 = vadd.f32 0.0, %v416
      %418 = vmatprep.mubr.bf16.mxu0 0
      %419 = vmatmul.mubr.bf16.gmra.mxu0 %v342
      %v420 = vpop.f32.mrf.mxu0
      %v421 = vadd.f32 0.0, %v420
      %v422 = vpop.f32.mrf.mxu0
      %v423 = vadd.f32 0.0, %v422
      %v424 = vpop.f32.mrf.mxu0
      %v425 = vadd.f32 0.0, %v424
      %v426 = vpop.f32.mrf.mxu0
      %v427 = vadd.f32 0.0, %v426
      %428 = vmatprep.mubr.bf16.mxu0 0
      %429 = vmatmul.mubr.bf16.gmra.mxu0 %v345
      %v430 = vpop.f32.mrf.mxu0
      %v431 = vadd.f32 0.0, %v430
      %v432 = vpop.f32.mrf.mxu0
      %v433 = vadd.f32 0.0, %v432
      %v434 = vpop.f32.mrf.mxu0
      %v435 = vadd.f32 0.0, %v434
      %v436 = vpop.f32.mrf.mxu0
      %v437 = vadd.f32 0.0, %v436
      %438 = vmatprep.mubr.bf16.mxu0 0
      %439 = vmatmul.mubr.bf16.gmra.mxu0 %v348
      %v440 = vpop.f32.mrf.mxu0
      %v441 = vadd.f32 0.0, %v440
      %v442 = vpop.f32.mrf.mxu0
      %v443 = vadd.f32 0.0, %v442
      %v444 = vpop.f32.mrf.mxu0
      %v445 = vadd.f32 0.0, %v444
      %v446 = vpop.f32.mrf.mxu0
      %v447 = vadd.f32 0.0, %v446
      %448 = vmatprep.mubr.bf16.mxu0 0
      %449 = vmatmul.mubr.bf16.gmra.mxu0 %v351
      %v450 = vpop.f32.mrf.mxu0
      %v451 = vadd.f32 0.0, %v450
      %v452 = vpop.f32.mrf.mxu0
      %v453 = vadd.f32 0.0, %v452
      %v454 = vpop.f32.mrf.mxu0
      %v455 = vadd.f32 0.0, %v454
      %v456 = vpop.f32.mrf.mxu0
      %v457 = vadd.f32 0.0, %v456
      %458 = vmatprep.mubr.bf16.mxu0 0
      %459 = vmatmul.mubr.bf16.gmra.mxu0 %v354
      %v460 = vpop.f32.mrf.mxu0
      %v461 = vadd.f32 0.0, %v460
      %v462 = vpop.f32.mrf.mxu0
      %v463 = vadd.f32 0.0, %v462
      %v464 = vpop.f32.mrf.mxu0
      %v465 = vadd.f32 0.0, %v464
      %v466 = vpop.f32.mrf.mxu0
      %v467 = vadd.f32 0.0, %v466
      %468 = vmatprep.mubr.bf16.mxu0 0
      %469 = vmatmul.mubr.bf16.gmra.mxu0 %v357
      %v470 = vpop.f32.mrf.mxu0
      %v471 = vadd.f32 0.0, %v470
      %v472 = vpop.f32.mrf.mxu0
      %v473 = vadd.f32 0.0, %v472
      %v474 = vpop.f32.mrf.mxu0
      %v475 = vadd.f32 0.0, %v474
      %v476 = vpop.f32.mrf.mxu0
      %v477 = vadd.f32 0.0, %v476
      %478 = vdwg.mxu0
      %v479 = vmax.f32 %v401, %v403
      %480 = vmax.xlane.f32.xlu0 %v479
      %v481 = vpop.xlane.xlu0 %480
      %v482 = vmax.f32 %v405, %v407
      %483 = vmax.xlane.f32.xlu0 %v482
      %v484 = vpop.xlane.xlu0 %483
      %v485 = vmax.f32 %v411, %v413
      %486 = vmax.xlane.f32.xlu0 %v485
      %v487 = vpop.xlane.xlu0 %486
      %v488 = vmax.f32 %v415, %v417
      %489 = vmax.xlane.f32.xlu0 %v488
      %v490 = vpop.xlane.xlu0 %489
      %v491 = vmax.f32 %v421, %v423
      %492 = vmax.xlane.f32.xlu0 %v491
      %v493 = vpop.xlane.xlu0 %492
      %v494 = vmax.f32 %v425, %v427
      %495 = vmax.xlane.f32.xlu0 %v494
      %v496 = vpop.xlane.xlu0 %495
      %v497 = vmax.f32 %v431, %v433
      %498 = vmax.xlane.f32.xlu0 %v497
      %v499 = vpop.xlane.xlu0 %498
      %v500 = vmax.f32 %v435, %v437
      %501 = vmax.xlane.f32.xlu0 %v500
      %v502 = vpop.xlane.xlu0 %501
      %v503 = vmax.f32 %v441, %v443
      %504 = vmax.xlane.f32.xlu0 %v503
      %v505 = vpop.xlane.xlu0 %504
      %v506 = vmax.f32 %v445, %v447
      %507 = vmax.xlane.f32.xlu0 %v506
      %v508 = vpop.xlane.xlu0 %507
      %v509 = vmax.f32 %v451, %v453
      %510 = vmax.xlane.f32.xlu0 %v509
      %v511 = vpop.xlane.xlu0 %510
      %v512 = vmax.f32 %v455, %v457
      %513 = vmax.xlane.f32.xlu0 %v512
      %v514 = vpop.xlane.xlu0 %513
      %v515 = vmax.f32 %v461, %v463
      %516 = vmax.xlane.f32.xlu0 %v515
      %v517 = vpop.xlane.xlu0 %516
      %v518 = vmax.f32 %v465, %v467
      %519 = vmax.xlane.f32.xlu0 %v518
      %v520 = vpop.xlane.xlu0 %519
      %v521 = vmax.f32 %v471, %v473
      %522 = vmax.xlane.f32.xlu0 %v521
      %v523 = vpop.xlane.xlu0 %522
      %v524 = vmax.f32 %v475, %v477
      %525 = vmax.xlane.f32.xlu0 %v524
      %v526 = vpop.xlane.xlu0 %525
      %v527 = vsub.f32 %v401, %v481
      %v528 = vsub.f32 %v403, %v481
      %v529 = vsub.f32 %v405, %v484
      %v530 = vsub.f32 %v407, %v484
      %v531 = vsub.f32 %v411, %v487
      %v532 = vsub.f32 %v413, %v487
      %v533 = vsub.f32 %v415, %v490
      %v534 = vsub.f32 %v417, %v490
      %v535 = vsub.f32 %v421, %v493
      %v536 = vsub.f32 %v423, %v493
      %v537 = vsub.f32 %v425, %v496
      %v538 = vsub.f32 %v427, %v496
      %v539 = vsub.f32 %v431, %v499
      %v540 = vsub.f32 %v433, %v499
      %v541 = vsub.f32 %v435, %v502
      %v542 = vsub.f32 %v437, %v502
      %v543 = vsub.f32 %v441, %v505
      %v544 = vsub.f32 %v443, %v505
      %v545 = vsub.f32 %v445, %v508
      %v546 = vsub.f32 %v447, %v508
      %v547 = vsub.f32 %v451, %v511
      %v548 = vsub.f32 %v453, %v511
      %v549 = vsub.f32 %v455, %v514
      %v550 = vsub.f32 %v457, %v514
      %v551 = vsub.f32 %v461, %v517
      %v552 = vsub.f32 %v463, %v517
      %v553 = vsub.f32 %v465, %v520
      %v554 = vsub.f32 %v467, %v520
      %v555 = vsub.f32 %v471, %v523
      %v556 = vsub.f32 %v473, %v523
      %v557 = vsub.f32 %v475, %v526
      %v558 = vsub.f32 %v477, %v526
      %v559 = vpack.c.bf16 %v529, %v527
      %v560 = vpack.c.bf16 %v530, %v528
      %v561 = vpack.c.bf16 %v533, %v531
      %v562 = vpack.c.bf16 %v534, %v532
      %v563 = vpack.c.bf16 %v537, %v535
      %v564 = vpack.c.bf16 %v538, %v536
      %v565 = vpack.c.bf16 %v541, %v539
      %v566 = vpack.c.bf16 %v542, %v540
      %v567 = vpack.c.bf16 %v545, %v543
      %v568 = vpack.c.bf16 %v546, %v544
      %v569 = vpack.c.bf16 %v549, %v547
      %v570 = vpack.c.bf16 %v550, %v548
      %v571 = vpack.c.bf16 %v553, %v551
      %v572 = vpack.c.bf16 %v554, %v552
      %v573 = vpack.c.bf16 %v557, %v555
      %v574 = vpack.c.bf16 %v558, %v556
      %v576 = vmul.bf16 %v559, 1069105081
      %v577 = vpow.bf16.pop %v576
      %v579 = vmul.bf16 %v560, 1069105081
      %v580 = vpow.bf16.pop %v579
      %v582 = vmul.bf16 %v561, 1069105081
      %v583 = vpow.bf16.pop %v582
      %v585 = vmul.bf16 %v562, 1069105081
      %v586 = vpow.bf16.pop %v585
      %v588 = vmul.bf16 %v563, 1069105081
      %v589 = vpow.bf16.pop %v588
      %v591 = vmul.bf16 %v564, 1069105081
      %v592 = vpow.bf16.pop %v591
      %v594 = vmul.bf16 %v565, 1069105081
      %v595 = vpow.bf16.pop %v594
      %v597 = vmul.bf16 %v566, 1069105081
      %v598 = vpow.bf16.pop %v597
      %v600 = vmul.bf16 %v567, 1069105081
      %v601 = vpow.bf16.pop %v600
      %v603 = vmul.bf16 %v568, 1069105081
      %v604 = vpow.bf16.pop %v603
      %v606 = vmul.bf16 %v569, 1069105081
      %v607 = vpow.bf16.pop %v606
      %v609 = vmul.bf16 %v570, 1069105081
      %v610 = vpow.bf16.pop %v609
      %v612 = vmul.bf16 %v571, 1069105081
      %v613 = vpow.bf16.pop %v612
      %v615 = vmul.bf16 %v572, 1069105081
      %v616 = vpow.bf16.pop %v615
      %v618 = vmul.bf16 %v573, 1069105081
      %v619 = vpow.bf16.pop %v618
      %v621 = vmul.bf16 %v574, 1069105081
      %v622 = vpow.bf16.pop %v621
      %v623 = vunpack.c.l.bf16 %v577
      %v624 = vunpack.c.l.bf16 %v580
      %v625 = vunpack.c.h.bf16 %v577
      %v626 = vunpack.c.h.bf16 %v580
      %v627 = vunpack.c.l.bf16 %v583
      %v628 = vunpack.c.l.bf16 %v586
      %v629 = vunpack.c.h.bf16 %v583
      %v630 = vunpack.c.h.bf16 %v586
      %v631 = vunpack.c.l.bf16 %v589
      %v632 = vunpack.c.l.bf16 %v592
      %v633 = vunpack.c.h.bf16 %v589
      %v634 = vunpack.c.h.bf16 %v592
      %v635 = vunpack.c.l.bf16 %v595
      %v636 = vunpack.c.l.bf16 %v598
      %v637 = vunpack.c.h.bf16 %v595
      %v638 = vunpack.c.h.bf16 %v598
      %v639 = vunpack.c.l.bf16 %v601
      %v640 = vunpack.c.l.bf16 %v604
      %v641 = vunpack.c.h.bf16 %v601
      %v642 = vunpack.c.h.bf16 %v604
      %v643 = vunpack.c.l.bf16 %v607
      %v644 = vunpack.c.l.bf16 %v610
      %v645 = vunpack.c.h.bf16 %v607
      %v646 = vunpack.c.h.bf16 %v610
      %v647 = vunpack.c.l.bf16 %v613
      %v648 = vunpack.c.l.bf16 %v616
      %v649 = vunpack.c.h.bf16 %v613
      %v650 = vunpack.c.h.bf16 %v616
      %v651 = vunpack.c.l.bf16 %v619
      %v652 = vunpack.c.l.bf16 %v622
      %v653 = vunpack.c.h.bf16 %v619
      %v654 = vunpack.c.h.bf16 %v622
      %v655 = vadd.f32 %v623, %v624
      %656 = vadd.xlane.f32.xlu0 %v655
      %v657 = vpop.xlane.xlu0 %656
      %v658 = vadd.f32 %v625, %v626
      %659 = vadd.xlane.f32.xlu0 %v658
      %v660 = vpop.xlane.xlu0 %659
      %v661 = vadd.f32 %v627, %v628
      %662 = vadd.xlane.f32.xlu0 %v661
      %v663 = vpop.xlane.xlu0 %662
      %v664 = vadd.f32 %v629, %v630
      %665 = vadd.xlane.f32.xlu0 %v664
      %v666 = vpop.xlane.xlu0 %665
      %v667 = vadd.f32 %v631, %v632
      %668 = vadd.xlane.f32.xlu0 %v667
      %v669 = vpop.xlane.xlu0 %668
      %v670 = vadd.f32 %v633, %v634
      %671 = vadd.xlane.f32.xlu0 %v670
      %v672 = vpop.xlane.xlu0 %671
      %v673 = vadd.f32 %v635, %v636
      %674 = vadd.xlane.f32.xlu0 %v673
      %v675 = vpop.xlane.xlu0 %674
      %v676 = vadd.f32 %v637, %v638
      %677 = vadd.xlane.f32.xlu0 %v676
      %v678 = vpop.xlane.xlu0 %677
      %v679 = vadd.f32 %v639, %v640
      %680 = vadd.xlane.f32.xlu0 %v679
      %v681 = vpop.xlane.xlu0 %680
      %v682 = vadd.f32 %v641, %v642
      %683 = vadd.xlane.f32.xlu0 %v682
      %v684 = vpop.xlane.xlu0 %683
      %v685 = vadd.f32 %v643, %v644
      %686 = vadd.xlane.f32.xlu0 %v685
      %v687 = vpop.xlane.xlu0 %686
      %v688 = vadd.f32 %v645, %v646
      %689 = vadd.xlane.f32.xlu0 %v688
      %v690 = vpop.xlane.xlu0 %689
      %v691 = vadd.f32 %v647, %v648
      %692 = vadd.xlane.f32.xlu0 %v691
      %v693 = vpop.xlane.xlu0 %692
      %v694 = vadd.f32 %v649, %v650
      %695 = vadd.xlane.f32.xlu0 %v694
      %v696 = vpop.xlane.xlu0 %695
      %v697 = vadd.f32 %v651, %v652
      %698 = vadd.xlane.f32.xlu0 %v697
      %v699 = vpop.xlane.xlu0 %698
      %v700 = vadd.f32 %v653, %v654
      %701 = vadd.xlane.f32.xlu0 %v700
      %v702 = vpop.xlane.xlu0 %701
      %v703 = vrcp.pop %v657
      %v704 = vrcp.pop %v660
      %v705 = vrcp.pop %v663
      %v706 = vrcp.pop %v666
      %v707 = vrcp.pop %v669
      %v708 = vrcp.pop %v672
      %v709 = vrcp.pop %v675
      %v710 = vrcp.pop %v678
      %v711 = vrcp.pop %v681
      %v712 = vrcp.pop %v684
      %v713 = vrcp.pop %v687
      %v714 = vrcp.pop %v690
      %v715 = vrcp.pop %v693
      %v716 = vrcp.pop %v696
      %v717 = vrcp.pop %v699
      %v718 = vrcp.pop %v702
      %v719 = vld [vmem:[%s241] sm:$0xf]
      %v720 = vunpack.c.l.bf16 %v719
      %v737 = vlaneseq
      %v738 = vand.u32 %v737, 127
      %v739 = vlaneseq
      %v740 = vshrl.u32 %v739, 7
      %v741 = vsub.s32 %v738, %v740
      %v742 = vrot.slane %v703, %v741
      %v743 = vadd.s32 %v738, 4294967288
      %v744 = vlaneseq
      %v745 = vshrl.u32 %v744, 7
      %v746 = vsub.s32 %v743, %v745
      %v747 = vrot.slane %v704, %v746
      %vm748 = vcmask 130112
      %v749 = vsel %vm748, %v747, %v742
      %v750 = vadd.s32 %v738, 4294967280
      %v751 = vlaneseq
      %v752 = vshrl.u32 %v751, 7
      %v753 = vsub.s32 %v750, %v752
      %v754 = vrot.slane %v705, %v753
      %vm755 = vcmask 195712
      %v756 = vsel %vm755, %v754, %v749
      %v757 = vadd.s32 %v738, 4294967272
      %v758 = vlaneseq
      %v759 = vshrl.u32 %v758, 7
      %v760 = vsub.s32 %v757, %v759
      %v761 = vrot.slane %v706, %v760
      %vm762 = vcmask 261312
      %v763 = vsel %vm762, %v761, %v756
      %v764 = vadd.s32 %v738, 4294967264
      %v765 = vlaneseq
      %v766 = vshrl.u32 %v765, 7
      %v767 = vsub.s32 %v764, %v766
      %v768 = vrot.slane %v707, %v767
      %vm769 = vcmask 326912
      %v770 = vsel %vm769, %v768, %v763
      %v771 = vadd.s32 %v738, 4294967256
      %v772 = vlaneseq
      %v773 = vshrl.u32 %v772, 7
      %v774 = vsub.s32 %v771, %v773
      %v775 = vrot.slane %v708, %v774
      %vm776 = vcmask 392512
      %v777 = vsel %vm776, %v775, %v770
      %v778 = vadd.s32 %v738, 4294967248
      %v779 = vlaneseq
      %v780 = vshrl.u32 %v779, 7
      %v781 = vsub.s32 %v778, %v780
      %v782 = vrot.slane %v709, %v781
      %vm783 = vcmask 458112
      %v784 = vsel %vm783, %v782, %v777
      %v785 = vadd.s32 %v738, 4294967240
      %v786 = vlaneseq
      %v787 = vshrl.u32 %v786, 7
      %v788 = vsub.s32 %v785, %v787
      %v789 = vrot.slane %v710, %v788
      %vm790 = vcmask 523712
      %v791 = vsel %vm790, %v789, %v784
      %v792 = vadd.s32 %v738, 4294967232
      %v793 = vlaneseq
      %v794 = vshrl.u32 %v793, 7
      %v795 = vsub.s32 %v792, %v794
      %v796 = vrot.slane %v711, %v795
      %vm797 = vcmask 589312
      %v798 = vsel %vm797, %v796, %v791
      %v799 = vadd.s32 %v738, 4294967224
      %v800 = vlaneseq
      %v801 = vshrl.u32 %v800, 7
      %v802 = vsub.s32 %v799, %v801
      %v803 = vrot.slane %v712, %v802
      %vm804 = vcmask 654912
      %v805 = vsel %vm804, %v803, %v798
      %v806 = vadd.s32 %v738, 4294967216
      %v807 = vlaneseq
      %v808 = vshrl.u32 %v807, 7
      %v809 = vsub.s32 %v806, %v808
      %v810 = vrot.slane %v713, %v809
      %vm811 = vcmask 720512
      %v812 = vsel %vm811, %v810, %v805
      %v813 = vadd.s32 %v738, 4294967208
      %v814 = vlaneseq
      %v815 = vshrl.u32 %v814, 7
      %v816 = vsub.s32 %v813, %v815
      %v817 = vrot.slane %v714, %v816
      %vm818 = vcmask 786112
      %v819 = vsel %vm818, %v817, %v812
      %v820 = vadd.s32 %v738, 4294967200
      %v821 = vlaneseq
      %v822 = vshrl.u32 %v821, 7
      %v823 = vsub.s32 %v820, %v822
      %v824 = vrot.slane %v715, %v823
      %vm825 = vcmask 851712
      %v826 = vsel %vm825, %v824, %v819
      %v827 = vadd.s32 %v738, 4294967192
      %v828 = vlaneseq
      %v829 = vshrl.u32 %v828, 7
      %v830 = vsub.s32 %v827, %v829
      %v831 = vrot.slane %v716, %v830
      %vm832 = vcmask 917312
      %v833 = vsel %vm832, %v831, %v826
      %v834 = vadd.s32 %v738, 4294967184
      %v835 = vlaneseq
      %v836 = vshrl.u32 %v835, 7
      %v837 = vsub.s32 %v834, %v836
      %v838 = vrot.slane %v717, %v837
      %vm839 = vcmask 982912
      %v840 = vsel %vm839, %v838, %v833
      %v841 = vadd.s32 %v738, 4294967176
      %v842 = vlaneseq
      %v843 = vshrl.u32 %v842, 7
      %v844 = vsub.s32 %v841, %v843
      %v845 = vrot.slane %v718, %v844
      %vm846 = vcmask 1048512
      %v847 = vsel %vm846, %v845, %v840
      %vm848 = vcmask 1042434
      %v849 = vsel %vm848, %v847, %v847
      %vm850 = vcmask 1043459
      %v851 = vsel %vm850, %v847, %v849
      %vm852 = vcmask 1044484
      %v853 = vsel %vm852, %v847, %v851
      %vm854 = vcmask 1045509
      %v855 = vsel %vm854, %v847, %v853
      %vm856 = vcmask 1046534
      %v857 = vsel %vm856, %v847, %v855
      %vm858 = vcmask 1047559
      %v859 = vsel %vm858, %v847, %v857
      %v861 = vmul.f32 %v720, %v859
      %v862 = vpack.c.bf16 %v861, %v861
      %v863 = vld [vmem:[%s246] sm:$0xff]
      %v864 = vld [vmem:[%s246 + $0x8] sm:$0xff]
      %865 = vmatprep.subr.bf16.mxu0 %v622
      %866 = vmatpush1.bf16.msra.mxu0 %v619
      %867 = vmatprep.subr.bf16.mxu0 %v616
      %868 = vmatpush1.bf16.msra.mxu0 %v613
      %869 = vmatprep.subr.bf16.mxu0 %v610
      %870 = vmatpush1.bf16.msra.mxu0 %v607
      %871 = vmatprep.subr.bf16.mxu0 %v604
      %872 = vmatpush1.bf16.msra.mxu0 %v601
      %873 = vmatprep.subr.bf16.mxu0 %v598
      %874 = vmatpush1.bf16.msra.mxu0 %v595
      %875 = vmatprep.subr.bf16.mxu0 %v592
      %876 = vmatpush1.bf16.msra.mxu0 %v589
      %877 = vmatprep.subr.bf16.mxu0 %v586
      %878 = vmatpush1.bf16.msra.mxu0 %v583
      %879 = vmatprep.subr.bf16.mxu0 %v580
      %880 = vmatpush1.bf16.msra.mxu0 %v577
      %881 = vmatprep.subr.bf16.mxu0 0
      %882 = vmatpush2.bf16.msra.mxu0 0
      %883 = vmatprep.subr.bf16.mxu0 0
      %884 = vmatpush2.bf16.msra.mxu0 0
      %885 = vmatprep.subr.bf16.mxu0 0
      %886 = vmatpush2.bf16.msra.mxu0 0
      %887 = vmatprep.subr.bf16.mxu0 0
      %888 = vmatpush2.bf16.msra.mxu0 0
      %889 = vmatprep.subr.bf16.mxu0 0
      %890 = vmatpush2.bf16.msra.mxu0 0
      %891 = vmatprep.subr.bf16.mxu0 0
      %892 = vmatpush2.bf16.msra.mxu0 0
      %893 = vmatprep.subr.bf16.mxu0 0
      %894 = vmatpush2.bf16.msra.mxu0 0
      %895 = vmatprep.subr.bf16.mxu0 0
      %896 = vmatpush2.bf16.msra.mxu0 0
      %897 = vmatprep.mubr.bf16.mxu0 0
      %898 = vmatmul.mubr.bf16.gmra.mxu0 %v862
      %v899 = vpop.f32.mrf.mxu0
      %v900 = vadd.f32 0.0, %v899
      %v901 = vpop.f32.mrf.mxu0
      %v902 = vadd.f32 0.0, %v901
      %v903 = vpop.f32.mrf.mxu0
      %v904 = vpop.f32.mrf.mxu0
      %905 = vdwg.mxu0
      %v906 = vadd.f32 %v863, %v900
      %v907 = vadd.f32 %v864, %v902
      %908 = vst [vmem:[%s246] sm:$0xff] %v906
      %909 = vst [vmem:[%s246 + $0x8] sm:$0xff] %v907
      %p910 = scmp.lt.s32.totalorder %s18, 1
      %s911 = scalar_select %p910, %s18, 1
      %s912 = smul.addr %s911, 2
      %s913 = smul.addr %s912, 8
      %s914 = scalar_lea.vmem %s3, %s913
      // Predicated region
      $region37: #{cross_attention_pallas.1} parent=31 // pred_check
        %p915 = pneg %p126
      $region38: #{cross_attention_pallas.1} parent=31 // pred_check_branch
        %917 = sbr.rel (%p915) target = $region40
      $region39: #{cross_attention_pallas.1} parent=31 // pred_region
        _
      $region40: #{cross_attention_pallas.1} parent=31 // pred_fallthru
        _
    $region32: #{cross_attention_pallas.1} parent=5 // pred_fallthru
      _
    %p918 = scmp.le.s32.totalorder 2, %s9
    // Predicated region
    $region41: #{cross_attention_pallas.1} parent=5 // pred_check
      %p919 = pneg %p918
    $region42: #{cross_attention_pallas.1} parent=5 // pred_check_branch
      %921 = sbr.rel (%p919) target = $region44
    $region43: #{cross_attention_pallas.1} parent=5 // pred_region
      %s922 = ssub.s32 %s9, 2
      // Predicated region
      $region45: #{cross_attention_pallas.1} parent=43 // pred_check
        %p923 = pneg %p132
      $region46: #{cross_attention_pallas.1} parent=43 // pred_check_branch
        %925 = sbr.rel (%p923) target = $region48
      $region47: #{cross_attention_pallas.1} parent=43 // pred_region
        %p926 = scmp.lt.s32.totalorder %s20, 1
        %s927 = scalar_select %p926, %s20, 1
        %s928 = smul.addr %s927, 2
        %s929 = smul.addr %s928, 8
        %s930 = scalar_lea.vmem %s3, %s929
      $region48: #{cross_attention_pallas.1} parent=43 // pred_fallthru
        _
    $region44: #{cross_attention_pallas.1} parent=5 // pred_fallthru
      _
  $region6: #{cross_attention_pallas.1} parent=0 // loop_footer
    %s13 = sadd.s32 1, %s9
  $region7: #{cross_attention_pallas.1} parent=0 // loop_footer_branch
    %8 = sbr.rel target = $region3
  $region8: #{cross_attention_pallas.1} parent=0 // loop_exit
    _

</llo_original>
